<compile_context>
chip_gen: v5e
topology: v5e:2x2
jax: 0.10.0
libtpu: 0.0.40
codegen_flags: <defaults>
</compile_context>

<pallas_src>
import jax
import jax.numpy as jnp
from jax import lax
from jax.experimental import pallas as pl
from jax.experimental.pallas import tpu as pltpu


def _round_up(x, m):
    return ((x + m - 1) // m) * m


def _cdiv(a, b):
    return -(-a // b)


def _physical_vmem_bytes():
    try:
        return int(pltpu.get_tpu_info().vmem_capacity_bytes)
    except Exception:
        return 64 * 1024 * 1024  # conservative fallback: v7x per-TC VMEM


# ---------------------------------------------------------------------------
# Kernels
# ---------------------------------------------------------------------------

def _xwt(x, w):
    # z_tile = x_tile @ w_tile.T as a contraction on the shared last (K) axis:
    # the MXU consumes W in its natural (N, K) layout -- no XLU transpose on
    # the critical path.
    return lax.dot_general(
        x, w,
        dimension_numbers=(((1,), (1,)), ((), ())),
        preferred_element_type=jnp.float32,
    )


def _single_tile_kernel(x_ref, w_ref, z_ref):
    """Whole problem in one VMEM tile: z = x @ W^T in a single MXU pass."""
    z_ref[...] = _xwt(x_ref[...], w_ref[...]).astype(z_ref.dtype)


def _tiled_kernel_f32(x_ref, w_ref, z_ref):
    """f32 output: accumulate directly into the (K-resident) output block."""
    @pl.when(pl.program_id(2) == 0)
    def _init():
        z_ref[...] = jnp.zeros_like(z_ref)

    z_ref[...] += _xwt(x_ref[...], w_ref[...])


def _tiled_kernel_acc(x_ref, w_ref, z_ref, acc_ref):
    """Non-f32 output: f32 scratch accumulator + finalize cast."""
    @pl.when(pl.program_id(2) == 0)
    def _init():
        acc_ref[...] = jnp.zeros_like(acc_ref)

    acc_ref[...] += _xwt(x_ref[...], w_ref[...])

    @pl.when(pl.program_id(2) == pl.num_programs(2) - 1)
    def _finalize():
        z_ref[...] = acc_ref[...].astype(z_ref.dtype)


# ---------------------------------------------------------------------------
# Tile selection helpers
# ---------------------------------------------------------------------------

def _pick_block(dim, cap, aligns):
    """Choose a block size for one dimension.

    Returns (block, padded_dim). block is either the full `dim` (always a
    legal block shape) or a multiple of one of `aligns`; padded_dim is `dim`
    rounded up to a multiple of block (== dim when no padding is needed).
    Preference: full dim -> aligned divisor (no pad) -> minimal pad.
    """
    if dim <= cap:
        return dim, dim
    for align in aligns:
        t = (cap // align) * align
        while t >= align:
            if dim % t == 0:
                return t, dim
            t -= align
    align = max([a for a in aligns if a <= cap] or [aligns[-1]])
    tmax = max((cap // align) * align, align)
    n_blocks = _cdiv(dim, tmax)
    t = min(_round_up(_cdiv(dim, n_blocks), align), tmax)
    return t, _round_up(dim, t)


def _candidates(dim, caps, aligns):
    out = []
    for cap in caps:
        bp = _pick_block(dim, cap, aligns)
        if bp not in out:
            out.append(bp)
    return out


# ---------------------------------------------------------------------------
# Forward
# ---------------------------------------------------------------------------

def linear_enc_forward(x, weight, *, use_bf16_operands=False,
                       vmem_budget_bytes=None):
    """Pallas LinearEnc.forward: returns (weight, x @ weight.T)."""
    batch, input_dim = x.shape
    latent_dim, input_dim_w = weight.shape
    assert input_dim == input_dim_w, "x / weight input_dim mismatch"

    out_dtype = x.dtype
    # NOTE: a wrapper-side .astype(bf16) is itself a full HBM pass; only worth
    # it when operands are re-read by the grid or the kernel is MXU-bound.
    compute_x = x.astype(jnp.bfloat16) if use_bf16_operands else x
    compute_w = weight.astype(jnp.bfloat16) if use_bf16_operands else weight
    in_bytes = jnp.dtype(compute_x.dtype).itemsize
    out_bytes = jnp.dtype(out_dtype).itemsize
    use_scratch = jnp.dtype(out_dtype) != jnp.dtype(jnp.float32)

    phys_vmem = _physical_vmem_bytes()
    budget = (int(phys_vmem * 0.65) if vmem_budget_bytes is None
              else int(vmem_budget_bytes))

    def vmem_tiles_bytes(tm, tn, tk):
        b = 2 * (tm * tk + tn * tk) * in_bytes + 2 * tm * tn * out_bytes
        if use_scratch:
            b += tm * tn * 4
        return b

    # ---- fast path: whole problem in one tile (no grid / scratch / pads) ---
    single_bytes = ((batch + latent_dim) * input_dim * in_bytes
                    + batch * latent_dim * out_bytes
                    + batch * latent_dim * 4)
    if single_bytes <= budget:
        z = pl.pallas_call(
            _single_tile_kernel,
            out_shape=jax.ShapeDtypeStruct((batch, latent_dim), out_dtype),
        )(compute_x, compute_w)
        return weight, z

    # ---- tiled path: pick tiles with a VMEM-budgeted HBM-traffic model -----
    base_m_align = 16 if use_bf16_operands else 8
    # 256-multiple M tiles when batch is large (matches the 256-wide MXU on
    # v6e/v7x); fall back to the base alignment when no such divisor exists.
    m_aligns = [256, base_m_align] if batch >= 256 else [base_m_align]

    tm_caps = sorted({c for c in (batch, 1024, 512, 256, 128, 64, 32, 16, 8)
                      if c >= base_m_align}, reverse=True)
    tn_caps = sorted({latent_dim, 4096, 2048, 1024, 512, 256, 128}, reverse=True)
    tk_caps = sorted({input_dim, 4096, 2048, 1024, 512, 256, 128}, reverse=True)

    tm_cands = _candidates(batch, tm_caps, m_aligns)
    tn_cands = _candidates(latent_dim, tn_caps, [128])
    tk_cands = _candidates(input_dim, tk_caps, [128])

    step_bytes = 300_000  # ~0.35 us per grid step expressed as HBM-equivalent bytes

    best = None
    for tm_c, m_pad_c in tm_cands:
        for tn_c, n_pad_c in tn_cands:
            for tk_c, k_pad_c in tk_cands:
                if vmem_tiles_bytes(tm_c, tn_c, tk_c) > budget:
                    continue
                gm, gn, gk = m_pad_c // tm_c, n_pad_c // tn_c, k_pad_c // tk_c
                traffic = (gn * m_pad_c * k_pad_c * in_bytes   # x read per N tile
                           + gm * n_pad_c * k_pad_c * in_bytes  # W read per M tile
                           + m_pad_c * n_pad_c * out_bytes)     # z written once
                # Wrapper-side pad / slice ops are extra full HBM passes.
                if (m_pad_c, k_pad_c) != (batch, input_dim):
                    traffic += 2 * m_pad_c * k_pad_c * in_bytes
                if (n_pad_c, k_pad_c) != (latent_dim, input_dim):
                    traffic += 2 * n_pad_c * k_pad_c * in_bytes
                if (m_pad_c, n_pad_c) != (batch, latent_dim):
                    traffic += 2 * m_pad_c * n_pad_c * out_bytes
                cost = traffic + gm * gn * gk * step_bytes
                if best is None or cost < best[0]:
                    best = (cost, tm_c, tn_c, tk_c, m_pad_c, n_pad_c, k_pad_c)

    if best is None:  # pathological budget: use the smallest legal tiles
        tm, m_pad = tm_cands[-1]
        tn, n_pad = tn_cands[-1]
        tk, k_pad = tk_cands[-1]
    else:
        _, tm, tn, tk, m_pad, n_pad, k_pad = best

    # v7x megacore: make sure >=1 parallel grid axis has >=2 steps when the
    # problem is big; split the axis whose duplicated operand is smaller and
    # only when the split stays pad-free.
    x_bytes_total = batch * input_dim * in_bytes
    w_bytes_total = latent_dim * input_dim * in_bytes
    if m_pad // tm == 1 and n_pad // tn == 1:
        can_split_n = (latent_dim == n_pad and latent_dim >= 512
                       and (latent_dim // 2) % 128 == 0)
        can_split_m = (batch == m_pad and batch >= 512
                       and (batch // 2) % base_m_align == 0)
        if x_bytes_total <= w_bytes_total and can_split_n:
            tn = latent_dim // 2
        elif can_split_m:
            tm = batch // 2
        elif can_split_n:
            tn = latent_dim // 2

    # Zero-pad only when the tile search could not avoid it (K padding is
    # numerically a no-op; padded M/N rows are sliced off below).
    if (m_pad, k_pad) != (batch, input_dim):
        compute_x = jnp.pad(compute_x,
                            ((0, m_pad - batch), (0, k_pad - input_dim)))
    if (n_pad, k_pad) != (latent_dim, input_dim):
        compute_w = jnp.pad(compute_w,
                            ((0, n_pad - latent_dim), (0, k_pad - input_dim)))

    grid = (m_pad // tm, n_pad // tn, k_pad // tk)

    est = vmem_tiles_bytes(tm, tn, tk)
    # 96 MiB ceiling on v5e/v6e (128 MiB VMEM), 48 MiB on v7x (64 MiB VMEM).
    vmem_limit = int(min(phys_vmem * 3 // 4,
                         max(2 * est + (4 << 20), 32 << 20)))

    kernel = _tiled_kernel_acc if use_scratch else _tiled_kernel_f32
    scratch_shapes = ([pltpu.VMEM((tm, tn), jnp.float32)] if use_scratch else [])

    # NOTE: if a trace shows exposed DMA on short MXU steps, the input
    # BlockSpecs can take pipeline_mode=pl.Buffered(3) (re-check VMEM budget).
    z_full = pl.pallas_call(
        kernel,
        out_shape=jax.ShapeDtypeStruct((m_pad, n_pad), out_dtype),
        grid_spec=pltpu.PrefetchScalarGridSpec(
            num_scalar_prefetch=0,
            grid=grid,
            in_specs=[
                # x tile depends only on (i, k).
                pl.BlockSpec((tm, tk), lambda i, j, k: (i, k)),
                # W tile is independent of the batch-tile axis i.
                pl.BlockSpec((tn, tk), lambda i, j, k: (j, k)),
            ],
            out_specs=pl.BlockSpec((tm, tn), lambda i, j, k: (i, j)),
            scratch_shapes=scratch_shapes,
        ),
        compiler_params=pltpu.CompilerParams(
            # M/N independent (megacore-shardable); K is the reduction axis
            # carried in the resident output/accumulator -> "arbitrary", last.
            dimension_semantics=("parallel", "parallel", "arbitrary"),
            vmem_limit_bytes=vmem_limit,
        ),
    )(compute_x, compute_w)

    if (m_pad, n_pad) != (batch, latent_dim):
        z = z_full[:batch, :latent_dim]
    else:
        z = z_full

    # forward() returns (weight, z), matching the PyTorch module.
    return weight, z


def init_linear_enc_params(key, input_dim, latent_dim, dtype=jnp.float32):
    # nn.init.uniform_(Tensor(latent_dim, input_dim), a=-1/sqrt(d), b=1/sqrt(d))
    bound = 1.0 / float(input_dim) ** 0.5
    return jax.random.uniform(key, (latent_dim, input_dim), dtype=dtype,
                              minval=-bound, maxval=bound)


if __name__ == "__main__":
    key = jax.random.PRNGKey(0)
    k_w, k_x, k_w2, k_x2 = jax.random.split(key, 4)

    # Small shapes consistent with the module (single-tile fast path).
    batch, input_dim, latent_dim = 8, 32, 16
    weight = init_linear_enc_params(k_w, input_dim, latent_dim)
    x = jax.random.normal(k_x, (batch, input_dim), dtype=jnp.float32)

    w_out, z = linear_enc_forward(x, weight)
    jax.block_until_ready(z)

    z_ref = x @ weight.T
    assert w_out.shape == (latent_dim, input_dim)
    assert z.shape == (batch, latent_dim)
    assert jnp.allclose(z, z_ref, atol=2e-2, rtol=2e-2), "fast-path mismatch"

    # Exercise the tiled (grid + K-reduction) path deterministically on any
    # chip by forcing a tiny VMEM budget; shapes stay small.
    b2, d2, l2 = 128, 512, 192
    weight2 = init_linear_enc_params(k_w2, d2, l2)
    x2 = jax.random.normal(k_x2, (b2, d2), dtype=jnp.float32)
    _, z2 = linear_enc_forward(x2, weight2, vmem_budget_bytes=256 * 1024)
    jax.block_until_ready(z2)
    z2_ref = x2 @ weight2.T
    assert z2.shape == (b2, l2)
    assert jnp.allclose(z2, z2_ref, atol=2e-2, rtol=2e-2), "tiled-path mismatch"

    print("KERNEL_OK")
</pallas_src>

<mosaic_0001>
module attributes {stable_mosaic.version = 11 : i64} {
  func.func @_single_tile_kernel(%arg0: memref<8x32xf32, #tpu.memory_space<vmem>>, %arg1: memref<16x32xf32, #tpu.memory_space<vmem>>, %arg2: memref<8x16xf32, #tpu.memory_space<vmem>>) attributes {dimension_semantics = [], scalar_prefetch = 0 : i64, scratch_operands = 0 : i64, tpu.core_type = #tpu.core_type<tc>} {
    %c0 = arith.constant 0 : index
    %c0_0 = arith.constant 0 : index
    %0 = vector.load %arg0[%c0, %c0_0] : memref<8x32xf32, #tpu.memory_space<vmem>>, vector<8x32xf32>
    %c0_1 = arith.constant 0 : index
    %c0_2 = arith.constant 0 : index
    %1 = vector.load %arg1[%c0_1, %c0_2] : memref<16x32xf32, #tpu.memory_space<vmem>>, vector<16x32xf32>
    %cst = arith.constant dense<0.000000e+00> : vector<8x16xf32>
    %2 = tpu.matmul %0, %1, %cst {dimension_numbers = #tpu.dot_dimension_numbers<[1], [1], [0], [0], [0, 0, 1, 0], [], []>} : vector<8x32xf32>, vector<16x32xf32>, vector<8x16xf32> -> vector<8x16xf32>
    %c0_3 = arith.constant 0 : index
    %c0_4 = arith.constant 0 : index
    %3 = vector.load %arg2[%c0_3, %c0_4] : memref<8x16xf32, #tpu.memory_space<vmem>>, vector<8x16xf32>
    tpu.vector_store %arg2[%c0_3, %c0_4], %2 {strides = array<i32>} : memref<8x16xf32, #tpu.memory_space<vmem>>, vector<8x16xf32>,
    return
  }
}

</mosaic_0001>

<llo_original>
// kernel: tpu_custom_call.1
$region0: #{tpu_custom_call.1}
  #allocation0 [shape = 'u32[]', space=smem, size = 0x4, offset = 0x4, fixed_abs, tag = 'smem constant byte address 0x4 - core index']
  #allocation1 [shape = 'u32[72,128]{1,0:T(1,128)}', space=vmem, size = 0x9000, scoped, tag = 'internal scratch']
  %s0 = inlined_call_operand.hbm [shape: f32[8,32], index: 0, kind: input, shape index: {}]
  %s1 = inlined_call_operand.hbm [shape: f32[16,32], index: 1, kind: input, shape index: {}]
  %s2 = inlined_call_operand.hbm [shape: f32[8,16], index: 2, kind: output, shape index: {}]
  %s3 = sld [smem:[#allocation0]]
  $region26: #{tpu_custom_call.1} parent=0
    _
  %s5 = ssub.s32 1, %s3
  %s6 = scalar_select 0, %s5, %s3
  $region1: #{tpu_custom_call.1} parent=0
    #allocation2 [shape = 'u8[4096]{0}', space=vmem, size = 0x1000, scoped, tag = 'input window, operand 0, single buffered']
    #allocation3 [shape = 's32[1]{0}', space=sflag, size = 0x4, scoped, tag = 'scoped memory for tpu_custom_call.1']
    #allocation4 [shape = 's32[1]{0}', space=sflag, size = 0x4, scoped, tag = 'scoped memory for tpu_custom_call.1']
    #allocation5 [shape = 'u8[8192]{0}', space=vmem, size = 0x2000, scoped, tag = 'input window, operand 1, single buffered']
    #allocation6 [shape = 's32[1]{0}', space=sflag, size = 0x4, scoped, tag = 'scoped memory for tpu_custom_call.1']
    #allocation7 [shape = 'u8[4096]{0}', space=vmem, size = 0x1000, scoped, tag = 'output window, operand 0, single buffered']
    %7 = vsyncpa [#allocation3], 0
    %8 = vsyncpa [#allocation6], 0
    %9 = vsyncpa [#allocation4], 0
    // Predicated region
    $region2: #{tpu_custom_call.1} parent=1 // pred_check
      _
    $region3: #{tpu_custom_call.1} parent=1 // pred_check_branch
      %11 = sbr.rel (0) target = $region5
    $region4: #{tpu_custom_call.1} parent=1 // pred_region
      %13 = vsyncadd [#allocation3], 0
      %s15 = sshll.u32 %s0, 4
      %s16 = int_to_ptr.hbm [resolvable:$true] %s15
      %s17 = sshll.u32 [#allocation2], 4
      %s18 = int_to_ptr.vmem [resolvable:$true] %s17
      %20 = dma.hbm_to_vmem [thread:$0]  %s16, 128, %s18, [#allocation3]
    $region5: #{tpu_custom_call.1} parent=1 // pred_fallthru
      _
    // Predicated region
    $region6: #{tpu_custom_call.1} parent=1 // pred_check
      _
    $region7: #{tpu_custom_call.1} parent=1 // pred_check_branch
      %22 = sbr.rel (0) target = $region9
    $region8: #{tpu_custom_call.1} parent=1 // pred_region
      %24 = vsyncadd [#allocation6], 0
      %s25 = sshll.u32 %s1, 4
      %s26 = int_to_ptr.hbm [resolvable:$true] %s25
      %s27 = sshll.u32 [#allocation5], 4
      %s28 = int_to_ptr.vmem [resolvable:$true] %s27
      %33 = dma.hbm_to_vmem [thread:$0]  %s26, 256, %s28, [#allocation6], 128, 128, 8
    $region9: #{tpu_custom_call.1} parent=1 // pred_fallthru
      _
    // Predicated region
    $region10: #{tpu_custom_call.1} parent=1 // pred_check
      _
    $region11: #{tpu_custom_call.1} parent=1 // pred_check_branch
      %35 = sbr.rel (0) target = $region13
    $region12: #{tpu_custom_call.1} parent=1 // pred_region
      %37 = dma.done [#allocation3], 128
    $region13: #{tpu_custom_call.1} parent=1 // pred_fallthru
      _
    // Predicated region
    $region14: #{tpu_custom_call.1} parent=1 // pred_check
      _
    $region15: #{tpu_custom_call.1} parent=1 // pred_check_branch
      %39 = sbr.rel (0) target = $region17
    $region16: #{tpu_custom_call.1} parent=1 // pred_region
      %41 = dma.done [#allocation6], 256
    $region17: #{tpu_custom_call.1} parent=1 // pred_fallthru
      _
    %v42 = vld [vmem:[#allocation2] sm:$0xff]
    %v43 = vld [vmem:[#allocation5] sm:$0xff]
    %v44 = vld [vmem:[#allocation5 + $0x8] sm:$0xff]
    %vm45 = vcmask 261120
    %v47 = vsel %vm45, %v42, 0
    %v50 = vsel %vm45, %v43, 0
    %v53 = vsel %vm45, %v44, 0
    %55 = vmatpush.xpose.msra.mxu0 0.0
    %56 = vmatpush.xpose.msra.mxu0 0.0
    %57 = vmatpush.xpose.msra.mxu0 0.0
    %58 = vmatpush.xpose.msra.mxu0 0.0
    %59 = vmatpush.xpose.msra.mxu0 0.0
    %60 = vmatpush.xpose.msra.mxu0 0.0
    %61 = vmatpush.xpose.msra.mxu0 0.0
    %62 = vmatpush.xpose.msra.mxu0 0.0
    %63 = vmatpush.xpose.msra.mxu0 0.0
    %64 = vmatpush.xpose.msra.mxu0 0.0
    %65 = vmatpush.xpose.msra.mxu0 0.0
    %66 = vmatpush.xpose.msra.mxu0 0.0
    %67 = vmatpush.xpose.msra.mxu0 0.0
    %68 = vmatpush.xpose.msra.mxu0 0.0
    %69 = vmatpush.xpose.msra.mxu0 %v53
    %70 = vmatpush.xpose.msra.mxu0 %v50
    %71 = vmatmul.f32.gmra.mxu0 %v47
    %v72 = vpop.f32.mrf.mxu0
    %v73 = vadd.f32 0.0, %v72
    %74 = vdwg.mxu0
    %vm75 = vcmask 130048
    %76 = vst.msk [vmem:[#allocation7] sm:$0xff] %vm75, %v73
    // Predicated region
    $region18: #{tpu_custom_call.1} parent=1 // pred_check
      _
    $region19: #{tpu_custom_call.1} parent=1 // pred_check_branch
      %78 = sbr.rel (0) target = $region21
    $region20: #{tpu_custom_call.1} parent=1 // pred_region
      %80 = vsyncadd [#allocation4], 0
      %s82 = sshll.u32 [#allocation7], 4
      %s83 = int_to_ptr.vmem [resolvable:$true] %s82
      %s84 = sshll.u32 %s2, 4
      %s85 = int_to_ptr.hbm [resolvable:$true] %s84
      %87 = dma.vmem_to_hbm [thread:$0]  %s83, 128, %s85, [#allocation4]
    $region21: #{tpu_custom_call.1} parent=1 // pred_fallthru
      _
    // Predicated region
    $region22: #{tpu_custom_call.1} parent=1 // pred_check
      _
    $region23: #{tpu_custom_call.1} parent=1 // pred_check_branch
      %89 = sbr.rel (0) target = $region25
    $region24: #{tpu_custom_call.1} parent=1 // pred_region
      %91 = dma.done [#allocation4], 128
    $region25: #{tpu_custom_call.1} parent=1 // pred_fallthru
      _
    %92 = vsyncpa [#allocation3], 1
    %93 = vsyncpa [#allocation6], 1
    %94 = vsyncpa [#allocation4], 1

</llo_original>
